<compile_context>
chip_gen: v7x
topology: tpu7x:2x2x1
jax: 0.10.0
libtpu: 0.0.40
codegen_flags: <defaults>
</compile_context>

<pallas_src>
import functools

import jax
import jax.numpy as jnp
from jax.experimental import pallas as pl
from jax.experimental.pallas import tpu as pltpu

_LANE = 128


def _sublane_multiple(dtype) -> int:
    """Sublane packing granularity per dtype (8 for 32-bit, 16 bf16, 32 int8/fp8)."""
    itemsize = jnp.dtype(dtype).itemsize
    if itemsize >= 4:
        return 8
    if itemsize == 2:
        return 16
    return 32


def _lambda_kernel(x_ref, o_ref, *, f):
    """Apply the elementwise lambda `f` to one VMEM tile."""
    vals = f(x_ref[...])
    if vals.dtype != o_ref.dtype:       # skip the cast (and extra store path) if dtypes match
        vals = vals.astype(o_ref.dtype)
    o_ref[...] = vals


def pallas_lambda(x, f, *, lane_width=1024, target_tile_bytes=2 << 20):
    """Pallas implementation of Lambda(f) for elementwise, shape-preserving f.

    The tensor is flattened to a (rows, lane_width) slab (lane_width a large
    multiple of 128), padded so rows is a multiple of a dtype-aware,
    VMEM-budgeted tile height, processed over a 1-D parallel grid, then the
    padding is sliced off and the original shape restored.
    """
    orig_shape = x.shape

    # Determine f's output signature without running it.  Only shape-preserving
    # f runs on-chip; anything else falls back to plain JAX so Lambda semantics
    # are always preserved.
    out_aval = jax.eval_shape(f, jax.ShapeDtypeStruct(x.shape, x.dtype))
    if out_aval.shape != tuple(x.shape):
        # TODO(synk): shape-changing / reducing lambdas (view, mean, softmax over
        # an axis, ...) have no generic Pallas tiling; apply them as plain JAX.
        return f(x)
    out_dtype = out_aval.dtype

    n_total = int(x.size)
    if n_total == 0:
        return f(x)

    # --- lane-dense layout ---------------------------------------------------
    lane_width = max(_LANE, (int(lane_width) // _LANE) * _LANE)
    sub = max(_sublane_multiple(x.dtype), _sublane_multiple(out_dtype))
    itemsize = max(jnp.dtype(x.dtype).itemsize, jnp.dtype(out_dtype).itemsize)

    rows_needed = pl.cdiv(n_total, lane_width)
    rows_rounded = pl.cdiv(rows_needed, sub) * sub

    # Tile height from a ~target_tile_bytes VMEM budget (double-buffered in+out
    # => ~4x tile bytes live; 2 MiB tiles fit every generation's scoped default),
    # clamped so a small input never requests a huge padded block.
    tile_rows = max(sub, (target_tile_bytes // (lane_width * itemsize)) // sub * sub)
    tile_rows = min(tile_rows, rows_rounded)

    num_tiles = pl.cdiv(rows_needed, tile_rows)
    rows_padded = num_tiles * tile_rows
    n_padded = rows_padded * lane_width

    x_flat = x.reshape(-1)
    if n_padded != n_total:
        x_flat = jnp.pad(x_flat, (0, n_padded - n_total))
    x2 = x_flat.reshape(rows_padded, lane_width)

    # --- pallas call ----------------------------------------------------------
    kernel = functools.partial(_lambda_kernel, f=f)
    tile_bytes = tile_rows * lane_width * itemsize
    # Explicit scoped-VMEM limit: enough for double-buffered in+out plus
    # headroom, capped well under v7x's 64 MiB physical VMEM.
    vmem_limit = int(min(48 << 20, max(16 << 20, 6 * tile_bytes)))

    out2 = pl.pallas_call(
        kernel,
        out_shape=jax.ShapeDtypeStruct((rows_padded, lane_width), out_dtype),
        grid_spec=pltpu.PrefetchScalarGridSpec(
            num_scalar_prefetch=0,
            grid=(num_tiles,),
            in_specs=[pl.BlockSpec((tile_rows, lane_width), lambda i: (i, 0))],
            out_specs=pl.BlockSpec((tile_rows, lane_width), lambda i: (i, 0)),
        ),
        compiler_params=pltpu.CompilerParams(
            dimension_semantics=("parallel",),
            vmem_limit_bytes=vmem_limit,
        ),
    )(x2)

    out_flat = out2.reshape(-1)
    if n_padded != n_total:
        out_flat = out_flat[:n_total]
    return out_flat.reshape(orig_shape)


class LambdaPallas:
    """Mirror of the PyTorch `Lambda` module: forward(x) = f(x)."""

    def __init__(self, f):
        self.f = f

    def __call__(self, x):
        return pallas_lambda(x, self.f)


if __name__ == "__main__":
    # Deterministic example input: NCHW, batch=2, channels=4, spatial=16.
    key = jax.random.PRNGKey(0)
    x = jax.random.normal(key, (2, 4, 16, 16), dtype=jnp.float32)

    # Representative elementwise lambda: f(x) = x * sigmoid(x)  (SiLU).
    f = lambda t: t * jax.nn.sigmoid(t)

    module = LambdaPallas(f)
    out = module(x)
    out = jax.block_until_ready(out)

    # Sanity check vs. plain-JAX reference of the same lambda.
    ref = f(x)
    assert out.shape == x.shape and out.dtype == x.dtype
    assert jnp.max(jnp.abs(out - ref)) < 1e-5

    # Fallback path: a shape-changing lambda must still behave like Lambda(f).
    g = lambda t: t.reshape(2, -1)
    out_g = jax.block_until_ready(LambdaPallas(g)(x))
    assert out_g.shape == (2, 4 * 16 * 16)
    assert jnp.array_equal(out_g, g(x))

    print("KERNEL_OK")
</pallas_src>

<mosaic_0001>
module attributes {stable_mosaic.version = 11 : i64} {
  func.func @_lambda_kernel(%arg0: i32, %arg1: memref<8x1024xf32, #tpu.memory_space<vmem>>, %arg2: memref<8x1024xf32, #tpu.memory_space<vmem>>) attributes {dimension_semantics = [#tpu.dimension_semantics<parallel>], iteration_bounds = array<i64: 1>, scalar_prefetch = 0 : i64, scratch_operands = 0 : i64, tpu.core_type = #tpu.core_type<tc>, window_params = [{transform_indices = @transform_0, window_bounds = array<i64: 8, 1024>}, {transform_indices = @transform_1, window_bounds = array<i64: 8, 1024>}]} {
    %c0 = arith.constant 0 : index
    %c0_0 = arith.constant 0 : index
    %0 = vector.load %arg1[%c0, %c0_0] : memref<8x1024xf32, #tpu.memory_space<vmem>>, vector<8x1024xf32>
    %1 = arith.negf %0 : vector<8x1024xf32>
    %2 = math.exp %1 : vector<8x1024xf32>
    %cst = arith.constant 1.000000e+00 : f32
    %3 = vector.broadcast %cst : f32 to vector<8x1024xf32>
    %4 = arith.addf %3, %2 : vector<8x1024xf32>
    %5 = arith.divf %3, %4 : vector<8x1024xf32>
    %6 = arith.mulf %0, %5 : vector<8x1024xf32>
    %c0_1 = arith.constant 0 : index
    %c0_2 = arith.constant 0 : index
    %7 = vector.load %arg2[%c0_1, %c0_2] : memref<8x1024xf32, #tpu.memory_space<vmem>>, vector<8x1024xf32>
    tpu.vector_store %arg2[%c0_1, %c0_2], %6 {strides = array<i32>} : memref<8x1024xf32, #tpu.memory_space<vmem>>, vector<8x1024xf32>,
    return
  }
  func.func @transform_0(%arg0: i32) -> (i32, i32) {
    %c0_i32 = arith.constant 0 : i32
    %c0_i32_0 = arith.constant 0 : i32
    return %arg0, %c0_i32 : i32, i32
  }
  func.func @transform_1(%arg0: i32) -> (i32, i32) {
    %c0_i32 = arith.constant 0 : i32
    %c0_i32_0 = arith.constant 0 : i32
    return %arg0, %c0_i32 : i32, i32
  }
}

</mosaic_0001>

<llo_original>
// kernel: tpu_custom_call.1
$region0: #{tpu_custom_call.1}
  #allocation0 [shape = 'u32[]', space=smem, size = 0x4, offset = 0x4, fixed_abs, tag = 'smem constant byte address 0x4 - core index']
  #allocation1 [shape = 'u32[144,128]{1,0:T(1,128)}', space=vmem, size = 0x12000, scoped, tag = 'internal scratch']
  %s0 = inlined_call_operand.hbm [shape: f32[8,1024], index: 0, kind: input, shape index: {}]
  %s1 = inlined_call_operand.hbm [shape: f32[8,1024], index: 1, kind: output, shape index: {}]
  %s2 = sld [smem:[#allocation0]]
  $region18: #{tpu_custom_call.1} parent=0
    _
  %s4 = ssub.s32 1, %s2
  %s5 = scalar_select 0, %s4, %s2
  $region1: #{tpu_custom_call.1} parent=0
    #allocation2 [shape = 'u8[32768]{0}', space=vmem, size = 0x8000, scoped, tag = 'input window, operand 0, single buffered']
    #allocation3 [shape = 's32[1]{0}', space=sflag, size = 0x4, scoped, tag = 'scoped memory for tpu_custom_call.1']
    #allocation4 [shape = 's32[1]{0}', space=sflag, size = 0x4, scoped, tag = 'scoped memory for tpu_custom_call.1']
    #allocation5 [shape = 'u8[32768]{0}', space=vmem, size = 0x8000, scoped, tag = 'output window, operand 0, single buffered']
    %6 = vsyncpa [#allocation3], 0
    %7 = vsyncpa [#allocation4], 0
    // Predicated region
    $region2: #{tpu_custom_call.1} parent=1 // pred_check
      _
    $region3: #{tpu_custom_call.1} parent=1 // pred_check_branch
      %9 = sbr.rel (0) target = $region5
    $region4: #{tpu_custom_call.1} parent=1 // pred_region
      %s11 = ssub.s32 1024, 1024
      %12 = vsyncadd [#allocation3], %s11
      %s14 = sshll.u32 [#allocation2], 4
      %s15 = int_to_ptr.vmem [resolvable:$true] %s14
      %17 = dma.hbm_to_vmem [thread:$0]  %s0, 1024, %s15, [#allocation3]
    $region5: #{tpu_custom_call.1} parent=1 // pred_fallthru
      _
    // Predicated region
    $region6: #{tpu_custom_call.1} parent=1 // pred_check
      _
    $region7: #{tpu_custom_call.1} parent=1 // pred_check_branch
      %19 = sbr.rel (0) target = $region9
    $region8: #{tpu_custom_call.1} parent=1 // pred_region
      %20 = dma.done [#allocation3], 1024
    $region9: #{tpu_custom_call.1} parent=1 // pred_fallthru
      _
    %v21 = vld [vmem:[#allocation2] sm:$0xff]
    %v22 = vld [vmem:[#allocation2 + $0x8] sm:$0xff]
    %v23 = vld [vmem:[#allocation2 + $0x10] sm:$0xff]
    %v24 = vld [vmem:[#allocation2 + $0x18] sm:$0xff]
    %v25 = vld [vmem:[#allocation2 + $0x20] sm:$0xff]
    %v26 = vld [vmem:[#allocation2 + $0x28] sm:$0xff]
    %v27 = vld [vmem:[#allocation2 + $0x30] sm:$0xff]
    %v28 = vld [vmem:[#allocation2 + $0x38] sm:$0xff]
    %v29 = vxor.u32 %v21, 2147483648
    %v30 = vxor.u32 %v22, 2147483648
    %v31 = vxor.u32 %v23, 2147483648
    %v32 = vxor.u32 %v24, 2147483648
    %v33 = vxor.u32 %v25, 2147483648
    %v34 = vxor.u32 %v26, 2147483648
    %v35 = vxor.u32 %v27, 2147483648
    %v36 = vxor.u32 %v28, 2147483648
    %v37 = vmul.f32 %v29, 1.442695
    %v38 = vpow.pop %v37
    %v39 = vmul.f32 %v30, 1.442695
    %v40 = vpow.pop %v39
    %v41 = vmul.f32 %v31, 1.442695
    %v42 = vpow.pop %v41
    %v43 = vmul.f32 %v32, 1.442695
    %v44 = vpow.pop %v43
    %v45 = vmul.f32 %v33, 1.442695
    %v46 = vpow.pop %v45
    %v47 = vmul.f32 %v34, 1.442695
    %v48 = vpow.pop %v47
    %v49 = vmul.f32 %v35, 1.442695
    %v50 = vpow.pop %v49
    %v51 = vmul.f32 %v36, 1.442695
    %v52 = vpow.pop %v51
    %v53 = vadd.f32 %v38, 1.0
    %v54 = vadd.f32 %v40, 1.0
    %v55 = vadd.f32 %v42, 1.0
    %v56 = vadd.f32 %v44, 1.0
    %v57 = vadd.f32 %v46, 1.0
    %v58 = vadd.f32 %v48, 1.0
    %v59 = vadd.f32 %v50, 1.0
    %v60 = vadd.f32 %v52, 1.0
    %v61 = vrcp.pop %v53
    %v62 = vmul.f32 1.0, %v61
    %v63 = vrcp.pop %v54
    %v64 = vmul.f32 1.0, %v63
    %v65 = vrcp.pop %v55
    %v66 = vmul.f32 1.0, %v65
    %v67 = vrcp.pop %v56
    %v68 = vmul.f32 1.0, %v67
    %v69 = vrcp.pop %v57
    %v70 = vmul.f32 1.0, %v69
    %v71 = vrcp.pop %v58
    %v72 = vmul.f32 1.0, %v71
    %v73 = vrcp.pop %v59
    %v74 = vmul.f32 1.0, %v73
    %v75 = vrcp.pop %v60
    %v76 = vmul.f32 1.0, %v75
    %v77 = vmul.f32 %v21, %v62
    %v78 = vmul.f32 %v22, %v64
    %v79 = vmul.f32 %v23, %v66
    %v80 = vmul.f32 %v24, %v68
    %v81 = vmul.f32 %v25, %v70
    %v82 = vmul.f32 %v26, %v72
    %v83 = vmul.f32 %v27, %v74
    %v84 = vmul.f32 %v28, %v76
    %85 = vst [vmem:[#allocation5] sm:$0xff] %v77
    %86 = vst [vmem:[#allocation5 + $0x8] sm:$0xff] %v78
    %87 = vst [vmem:[#allocation5 + $0x10] sm:$0xff] %v79
    %88 = vst [vmem:[#allocation5 + $0x18] sm:$0xff] %v80
    %89 = vst [vmem:[#allocation5 + $0x20] sm:$0xff] %v81
    %90 = vst [vmem:[#allocation5 + $0x28] sm:$0xff] %v82
    %91 = vst [vmem:[#allocation5 + $0x30] sm:$0xff] %v83
    %92 = vst [vmem:[#allocation5 + $0x38] sm:$0xff] %v84
    // Predicated region
    $region10: #{tpu_custom_call.1} parent=1 // pred_check
      _
    $region11: #{tpu_custom_call.1} parent=1 // pred_check_branch
      %94 = sbr.rel (0) target = $region13
    $region12: #{tpu_custom_call.1} parent=1 // pred_region
      %s96 = ssub.s32 1024, 1024
      %97 = vsyncadd [#allocation4], %s96
      %s99 = sshll.u32 [#allocation5], 4
      %s100 = int_to_ptr.vmem [resolvable:$true] %s99
      %102 = dma.vmem_to_hbm [thread:$0]  %s100, 1024, %s1, [#allocation4]
    $region13: #{tpu_custom_call.1} parent=1 // pred_fallthru
      _
    // Predicated region
    $region14: #{tpu_custom_call.1} parent=1 // pred_check
      _
    $region15: #{tpu_custom_call.1} parent=1 // pred_check_branch
      %104 = sbr.rel (0) target = $region17
    $region16: #{tpu_custom_call.1} parent=1 // pred_region
      %105 = dma.done [#allocation4], 1024
    $region17: #{tpu_custom_call.1} parent=1 // pred_fallthru
      _
    %106 = vsyncpa [#allocation3], 1
    %107 = vsyncpa [#allocation4], 1

</llo_original>
